<compile_context>
chip_gen: v7x
topology: tpu7x:2x2x1
jax: 0.10.0
libtpu: 0.0.40
codegen_flags: <defaults>
</compile_context>

<pallas_src>
import math

import jax
import jax.numpy as jnp
from jax.experimental import pallas as pl
from jax.experimental.pallas import tpu as pltpu


# ----------------------------- Pallas kernel ------------------------------- #

def _make_mlp_kernel(num_layers):
    """Fused MLP kernel: x -> [Linear (+folded BN) -> ReLU] * (L-1) -> Linear.

    refs = (x_ref, w1, b1, w2, b2, ..., wL, bL, o_ref)
      x_ref : (TM, D_in)      row tile of the flattened input
      wi    : (D_i, D_{i+1})  full weight (in, out) -> output features on lanes
      bi    : (1, D_{i+1})
      o_ref : (TM, D_out)
    All intermediates stay in vregs/VMEM.
    """
    def kernel(*refs):
        x_ref = refs[0]
        o_ref = refs[-1]
        wb = refs[1:-1]
        h = x_ref[...]
        for i in range(num_layers):
            w = wb[2 * i][...]
            b = wb[2 * i + 1][...]
            # default MXU precision, f32 accumulation
            h = jnp.dot(h, w, preferred_element_type=jnp.float32) + b
            if i < num_layers - 1:          # ReLU on all but the last layer
                h = jnp.maximum(h, 0.0)
        o_ref[...] = h.astype(o_ref.dtype)
    return kernel


def _round_up(x, m):
    return ((x + m - 1) // m) * m


def mlp_forward(x, params, *, tm=512):
    """Run the fused MLP kernel.  x: (..., D_in); params: list of (w, b)."""
    weights = [w for (w, _) in params]
    biases = [b for (_, b) in params]
    num_layers = len(weights)

    lead = x.shape[:-1]
    d_in = x.shape[-1]
    d_out = weights[-1].shape[-1]
    m = 1
    for s in lead:
        m *= s
    x2 = x.reshape(m, d_in).astype(jnp.float32)

    # Pad rows so the (8,128) sublane rule holds and the grid tiles evenly.
    m_pad = _round_up(m, 8)
    tm = min(tm, m_pad)
    m_pad = _round_up(m_pad, tm)
    if m_pad != m:
        x2 = jnp.pad(x2, ((0, m_pad - m), (0, 0)))

    in_specs = [pl.BlockSpec((tm, d_in), lambda i: (i, 0))]
    args = [x2]
    for w, b in zip(weights, biases):
        # Full weight/bias, constant index_map -> resident in VMEM across tiles.
        in_specs.append(pl.BlockSpec(w.shape, lambda i: (0, 0)))
        in_specs.append(pl.BlockSpec(b.shape, lambda i: (0, 0)))
        args.append(w.astype(jnp.float32))
        args.append(b.astype(jnp.float32))

    out = pl.pallas_call(
        _make_mlp_kernel(num_layers),
        out_shape=jax.ShapeDtypeStruct((m_pad, d_out), jnp.float32),
        grid=(m_pad // tm,),
        in_specs=in_specs,
        out_specs=pl.BlockSpec((tm, d_out), lambda i: (i, 0)),
        compiler_params=pltpu.CompilerParams(dimension_semantics=("parallel",)),
    )(*args)

    return out[:m].reshape(*lead, d_out)


# ----------------------------- parameter setup ----------------------------- #

def make_mlp_params(key, input_dim, hidden_dim, output_dim, num_layers,
                    BN=False, eps=1e-5):
    """nn.Linear-style init; weights stored transposed (in, out) for lane-dense output.

    If BN=True, the eval-mode BatchNorm1d (default running stats: mean=0, var=1,
    gamma=1, beta=0) is folded into the Linear at prep time: w' = w*s, b' = b*s + t.
    """
    dims = [input_dim] + [hidden_dim] * (num_layers - 1) + [output_dim]
    keys = jax.random.split(key, 2 * num_layers)
    params = []
    for i in range(num_layers):
        n, k = dims[i], dims[i + 1]
        bound = 1.0 / math.sqrt(n)
        w = jax.random.uniform(keys[2 * i], (n, k), jnp.float32, -bound, bound)
        b = jax.random.uniform(keys[2 * i + 1], (1, k), jnp.float32, -bound, bound)
        if BN:
            s = 1.0 / math.sqrt(1.0 + eps)   # gamma=1, beta=0, mean=0, var=1
            w = w * s
            b = b * s
            # TODO(synk): training-mode BN uses batch statistics; with real
            # checkpoint stats fold s = gamma/sqrt(var+eps), t = beta - mean*s.
        params.append((w, b))
    return params


# ----------------------------- pure-JAX reference --------------------------- #

def mlp_reference(x, params):
    n = len(params)
    h = x
    for i, (w, b) in enumerate(params):
        h = h @ w + b
        if i < n - 1:
            h = jnp.maximum(h, 0.0)
    return h


# ----------------------------------- main ----------------------------------- #

if __name__ == "__main__":
    # Small shapes consistent with the module: batch=2, seq=8, input_dim=16,
    # hidden_dim=32, output_dim=4, num_layers=3.
    B, SEQ, IN_DIM, HIDDEN, OUT_DIM, NUM_LAYERS = 2, 8, 16, 32, 4, 3

    root = jax.random.PRNGKey(0)
    kx, kp, kp_bn = jax.random.split(root, 3)
    x = jax.random.normal(kx, (B, SEQ, IN_DIM), jnp.float32)

    # BN=False (module default)
    params = make_mlp_params(kp, IN_DIM, HIDDEN, OUT_DIM, NUM_LAYERS, BN=False)
    y = jax.block_until_ready(mlp_forward(x, params))
    assert y.shape == (B, SEQ, OUT_DIM)
    y_ref = mlp_reference(x, params)
    assert jnp.allclose(y, y_ref, atol=2e-3, rtol=2e-3)

    # BN=True (eval-mode BN folded into the Linear weights at prep time)
    params_bn = make_mlp_params(kp_bn, IN_DIM, HIDDEN, OUT_DIM, NUM_LAYERS, BN=True)
    y_bn = jax.block_until_ready(mlp_forward(x, params_bn))
    assert y_bn.shape == (B, SEQ, OUT_DIM)
    y_bn_ref = mlp_reference(x, params_bn)
    assert jnp.allclose(y_bn, y_bn_ref, atol=2e-3, rtol=2e-3)

    print("KERNEL_OK")
</pallas_src>

<mosaic_0001>
module attributes {stable_mosaic.version = 11 : i64} {
  func.func @kernel(%arg0: i32, %arg1: memref<16x16xf32, #tpu.memory_space<vmem>>, %arg2: memref<16x32xf32, #tpu.memory_space<vmem>>, %arg3: memref<1x32xf32, #tpu.memory_space<vmem>>, %arg4: memref<32x32xf32, #tpu.memory_space<vmem>>, %arg5: memref<1x32xf32, #tpu.memory_space<vmem>>, %arg6: memref<32x4xf32, #tpu.memory_space<vmem>>, %arg7: memref<1x4xf32, #tpu.memory_space<vmem>>, %arg8: memref<16x4xf32, #tpu.memory_space<vmem>>) attributes {dimension_semantics = [#tpu.dimension_semantics<parallel>], iteration_bounds = array<i64: 1>, scalar_prefetch = 0 : i64, scratch_operands = 0 : i64, tpu.core_type = #tpu.core_type<tc>, window_params = [{transform_indices = @transform_0, window_bounds = array<i64: 16, 16>}, {pipeline_mode = #tpu.pipeline_mode<synchronous>, transform_indices = @transform_1, window_bounds = array<i64: 16, 32>}, {pipeline_mode = #tpu.pipeline_mode<synchronous>, transform_indices = @transform_2, window_bounds = array<i64: 1, 32>}, {pipeline_mode = #tpu.pipeline_mode<synchronous>, transform_indices = @transform_3, window_bounds = array<i64: 32, 32>}, {pipeline_mode = #tpu.pipeline_mode<synchronous>, transform_indices = @transform_4, window_bounds = array<i64: 1, 32>}, {pipeline_mode = #tpu.pipeline_mode<synchronous>, transform_indices = @transform_5, window_bounds = array<i64: 32, 4>}, {pipeline_mode = #tpu.pipeline_mode<synchronous>, transform_indices = @transform_6, window_bounds = array<i64: 1, 4>}, {transform_indices = @transform_7, window_bounds = array<i64: 16, 4>}]} {
    %c0 = arith.constant 0 : index
    %c0_0 = arith.constant 0 : index
    %0 = vector.load %arg1[%c0, %c0_0] : memref<16x16xf32, #tpu.memory_space<vmem>>, vector<16x16xf32>
    %c0_1 = arith.constant 0 : index
    %c0_2 = arith.constant 0 : index
    %1 = vector.load %arg2[%c0_1, %c0_2] : memref<16x32xf32, #tpu.memory_space<vmem>>, vector<16x32xf32>
    %c0_3 = arith.constant 0 : index
    %c0_4 = arith.constant 0 : index
    %2 = vector.load %arg3[%c0_3, %c0_4] : memref<1x32xf32, #tpu.memory_space<vmem>>, vector<1x32xf32>
    %cst = arith.constant dense<0.000000e+00> : vector<16x32xf32>
    %3 = tpu.matmul %0, %1, %cst {dimension_numbers = #tpu.dot_dimension_numbers<[1], [0], [0], [1], [0, 0, 1, 1], [], []>} : vector<16x16xf32>, vector<16x32xf32>, vector<16x32xf32> -> vector<16x32xf32>
    %4 = vector.broadcast %2 : vector<1x32xf32> to vector<16x32xf32>
    %5 = arith.addf %3, %4 : vector<16x32xf32>
    %cst_5 = arith.constant 0.000000e+00 : f32
    %6 = vector.broadcast %cst_5 : f32 to vector<16x32xf32>
    %7 = arith.maximumf %5, %6 : vector<16x32xf32>
    %c0_6 = arith.constant 0 : index
    %c0_7 = arith.constant 0 : index
    %8 = vector.load %arg4[%c0_6, %c0_7] : memref<32x32xf32, #tpu.memory_space<vmem>>, vector<32x32xf32>
    %c0_8 = arith.constant 0 : index
    %c0_9 = arith.constant 0 : index
    %9 = vector.load %arg5[%c0_8, %c0_9] : memref<1x32xf32, #tpu.memory_space<vmem>>, vector<1x32xf32>
    %cst_10 = arith.constant dense<0.000000e+00> : vector<16x32xf32>
    %10 = tpu.matmul %7, %8, %cst_10 {dimension_numbers = #tpu.dot_dimension_numbers<[1], [0], [0], [1], [0, 0, 1, 1], [], []>} : vector<16x32xf32>, vector<32x32xf32>, vector<16x32xf32> -> vector<16x32xf32>
    %11 = vector.broadcast %9 : vector<1x32xf32> to vector<16x32xf32>
    %12 = arith.addf %10, %11 : vector<16x32xf32>
    %cst_11 = arith.constant 0.000000e+00 : f32
    %13 = vector.broadcast %cst_11 : f32 to vector<16x32xf32>
    %14 = arith.maximumf %12, %13 : vector<16x32xf32>
    %c0_12 = arith.constant 0 : index
    %c0_13 = arith.constant 0 : index
    %15 = vector.load %arg6[%c0_12, %c0_13] : memref<32x4xf32, #tpu.memory_space<vmem>>, vector<32x4xf32>
    %c0_14 = arith.constant 0 : index
    %c0_15 = arith.constant 0 : index
    %16 = vector.load %arg7[%c0_14, %c0_15] : memref<1x4xf32, #tpu.memory_space<vmem>>, vector<1x4xf32>
    %cst_16 = arith.constant dense<0.000000e+00> : vector<16x4xf32>
    %17 = tpu.matmul %14, %15, %cst_16 {dimension_numbers = #tpu.dot_dimension_numbers<[1], [0], [0], [1], [0, 0, 1, 1], [], []>} : vector<16x32xf32>, vector<32x4xf32>, vector<16x4xf32> -> vector<16x4xf32>
    %18 = vector.broadcast %16 : vector<1x4xf32> to vector<16x4xf32>
    %19 = arith.addf %17, %18 : vector<16x4xf32>
    %c0_17 = arith.constant 0 : index
    %c0_18 = arith.constant 0 : index
    %20 = vector.load %arg8[%c0_17, %c0_18] : memref<16x4xf32, #tpu.memory_space<vmem>>, vector<16x4xf32>
    tpu.vector_store %arg8[%c0_17, %c0_18], %19 {strides = array<i32>} : memref<16x4xf32, #tpu.memory_space<vmem>>, vector<16x4xf32>,
    return
  }
  func.func @transform_0(%arg0: i32) -> (i32, i32) {
    %c0_i32 = arith.constant 0 : i32
    %c0_i32_0 = arith.constant 0 : i32
    return %arg0, %c0_i32 : i32, i32
  }
  func.func @transform_1(%arg0: i32) -> (i32, i32) {
    %c0_i32 = arith.constant 0 : i32
    %c0_i32_0 = arith.constant 0 : i32
    %c0_i32_1 = arith.constant 0 : i32
    return %c0_i32, %c0_i32_0 : i32, i32
  }
  func.func @transform_2(%arg0: i32) -> (i32, i32) {
    %c0_i32 = arith.constant 0 : i32
    %c0_i32_0 = arith.constant 0 : i32
    %c0_i32_1 = arith.constant 0 : i32
    return %c0_i32, %c0_i32_0 : i32, i32
  }
  func.func @transform_3(%arg0: i32) -> (i32, i32) {
    %c0_i32 = arith.constant 0 : i32
    %c0_i32_0 = arith.constant 0 : i32
    %c0_i32_1 = arith.constant 0 : i32
    return %c0_i32, %c0_i32_0 : i32, i32
  }
  func.func @transform_4(%arg0: i32) -> (i32, i32) {
    %c0_i32 = arith.constant 0 : i32
    %c0_i32_0 = arith.constant 0 : i32
    %c0_i32_1 = arith.constant 0 : i32
    return %c0_i32, %c0_i32_0 : i32, i32
  }
  func.func @transform_5(%arg0: i32) -> (i32, i32) {
    %c0_i32 = arith.constant 0 : i32
    %c0_i32_0 = arith.constant 0 : i32
    %c0_i32_1 = arith.constant 0 : i32
    return %c0_i32, %c0_i32_0 : i32, i32
  }
  func.func @transform_6(%arg0: i32) -> (i32, i32) {
    %c0_i32 = arith.constant 0 : i32
    %c0_i32_0 = arith.constant 0 : i32
    %c0_i32_1 = arith.constant 0 : i32
    return %c0_i32, %c0_i32_0 : i32, i32
  }
  func.func @transform_7(%arg0: i32) -> (i32, i32) {
    %c0_i32 = arith.constant 0 : i32
    %c0_i32_0 = arith.constant 0 : i32
    return %arg0, %c0_i32 : i32, i32
  }
}

</mosaic_0001>

<llo_original>
// kernel: tpu_custom_call.1
$region0: #{tpu_custom_call.1}
  #allocation0 [shape = 'u32[]', space=smem, size = 0x4, offset = 0x4, fixed_abs, tag = 'smem constant byte address 0x4 - core index']
  #allocation1 [shape = 'u32[144,128]{1,0:T(1,128)}', space=vmem, size = 0x12000, scoped, tag = 'internal scratch']
  %s0 = inlined_call_operand.hbm [shape: f32[16,16], index: 0, kind: input, shape index: {}]
  %s1 = inlined_call_operand.hbm [shape: f32[16,32], index: 1, kind: input, shape index: {}]
  %s2 = inlined_call_operand.vmem [shape: f32[1,32], index: 2, kind: input, shape index: {}]
  %s3 = inlined_call_operand.vmem [shape: f32[32,32], index: 3, kind: input, shape index: {}]
  %s4 = inlined_call_operand.vmem [shape: f32[1,32], index: 4, kind: input, shape index: {}]
  %s5 = inlined_call_operand.vmem [shape: f32[32,4], index: 5, kind: input, shape index: {}]
  %s6 = inlined_call_operand.vmem [shape: f32[1,4], index: 6, kind: input, shape index: {}]
  %s7 = inlined_call_operand.vmem [shape: f32[16,4], index: 7, kind: output, shape index: {}]
  %s8 = sld [smem:[#allocation0]]
  $region46: #{tpu_custom_call.1} parent=0
    _
  %s10 = ssub.s32 1, %s8
  %s11 = scalar_select 0, %s10, %s8
  $region1: #{tpu_custom_call.1} parent=0
    #allocation2 [shape = 'u8[8192]{0}', space=vmem, size = 0x2000, scoped, tag = 'input window, operand 0, single buffered']
    #allocation3 [shape = 's32[1]{0}', space=sflag, size = 0x4, scoped, tag = 'scoped memory for tpu_custom_call.1']
    #allocation4 [shape = 'u8[8192]{0}', space=vmem, size = 0x2000, scoped, tag = 'input window, operand 1, single buffered']
    #allocation5 [shape = 's32[1]{0}', space=sflag, size = 0x4, scoped, tag = 'scoped memory for tpu_custom_call.1']
    %12 = vsyncpa [#allocation3], 0
    %13 = vsyncpa [#allocation5], 0
    // Predicated region
    $region2: #{tpu_custom_call.1} parent=1 // pred_check
      _
    $region3: #{tpu_custom_call.1} parent=1 // pred_check_branch
      %15 = sbr.rel (0) target = $region5
    $region4: #{tpu_custom_call.1} parent=1 // pred_region
      %s17 = ssub.s32 256, 256
      %18 = vsyncadd [#allocation3], %s17
      %s19 = sshll.u32 [#allocation2], 4
      %s20 = int_to_ptr.vmem [resolvable:$true] %s19
      %25 = dma.hbm_to_vmem [thread:$0]  %s0, 256, %s20, [#allocation3], 128, 128, 8
    $region5: #{tpu_custom_call.1} parent=1 // pred_fallthru
      _
    // Predicated region
    $region6: #{tpu_custom_call.1} parent=1 // pred_check
      _
    $region7: #{tpu_custom_call.1} parent=1 // pred_check_branch
      %27 = sbr.rel (0) target = $region9
    $region8: #{tpu_custom_call.1} parent=1 // pred_region
      %s29 = ssub.s32 256, 256
      %30 = vsyncadd [#allocation5], %s29
      %s31 = sshll.u32 [#allocation4], 4
      %s32 = int_to_ptr.vmem [resolvable:$true] %s31
      %37 = dma.hbm_to_vmem [thread:$0]  %s1, 256, %s32, [#allocation5], 128, 128, 8
    $region9: #{tpu_custom_call.1} parent=1 // pred_fallthru
      _
    // Predicated region
    $region10: #{tpu_custom_call.1} parent=1 // pred_check
      _
    $region11: #{tpu_custom_call.1} parent=1 // pred_check_branch
      %39 = sbr.rel (0) target = $region13
    $region12: #{tpu_custom_call.1} parent=1 // pred_region
      _
    $region13: #{tpu_custom_call.1} parent=1 // pred_fallthru
      _
    // Predicated region
    $region14: #{tpu_custom_call.1} parent=1 // pred_check
      _
    $region15: #{tpu_custom_call.1} parent=1 // pred_check_branch
      %41 = sbr.rel (0) target = $region17
    $region16: #{tpu_custom_call.1} parent=1 // pred_region
      _
    $region17: #{tpu_custom_call.1} parent=1 // pred_fallthru
      _
    // Predicated region
    $region18: #{tpu_custom_call.1} parent=1 // pred_check
      _
    $region19: #{tpu_custom_call.1} parent=1 // pred_check_branch
      %43 = sbr.rel (0) target = $region21
    $region20: #{tpu_custom_call.1} parent=1 // pred_region
      _
    $region21: #{tpu_custom_call.1} parent=1 // pred_fallthru
      _
    // Predicated region
    $region22: #{tpu_custom_call.1} parent=1 // pred_check
      _
    $region23: #{tpu_custom_call.1} parent=1 // pred_check_branch
      %45 = sbr.rel (0) target = $region25
    $region24: #{tpu_custom_call.1} parent=1 // pred_region
      _
    $region25: #{tpu_custom_call.1} parent=1 // pred_fallthru
      _
    // Predicated region
    $region26: #{tpu_custom_call.1} parent=1 // pred_check
      _
    $region27: #{tpu_custom_call.1} parent=1 // pred_check_branch
      %47 = sbr.rel (0) target = $region29
    $region28: #{tpu_custom_call.1} parent=1 // pred_region
      _
    $region29: #{tpu_custom_call.1} parent=1 // pred_fallthru
      _
    // Predicated region
    $region30: #{tpu_custom_call.1} parent=1 // pred_check
      _
    $region31: #{tpu_custom_call.1} parent=1 // pred_check_branch
      %49 = sbr.rel (0) target = $region33
    $region32: #{tpu_custom_call.1} parent=1 // pred_region
      %50 = dma.done [#allocation3], 256
    $region33: #{tpu_custom_call.1} parent=1 // pred_fallthru
      _
    // Predicated region
    $region34: #{tpu_custom_call.1} parent=1 // pred_check
      _
    $region35: #{tpu_custom_call.1} parent=1 // pred_check_branch
      %52 = sbr.rel (0) target = $region37
    $region36: #{tpu_custom_call.1} parent=1 // pred_region
      %53 = dma.done [#allocation5], 256
    $region37: #{tpu_custom_call.1} parent=1 // pred_fallthru
      _
    %v54 = vld [vmem:[#allocation2] sm:$0xff]
    %v55 = vld [vmem:[#allocation2 + $0x8] sm:$0xff]
    %v56 = vld [vmem:[#allocation4] sm:$0xff]
    %v57 = vld [vmem:[#allocation4 + $0x8] sm:$0xff]
    %v58 = vld [vmem:[%s2] sm:$0x1]
    %v60 = vlaneseq
    %v61 = vshrl.u32 %v60, 7
    %v62 = vsub.s32 0, %v61
    %v63 = vrot.slane %v58, %v62
    %vm65 = vcmask 130048
    %v67 = vsel %vm65, %v54, 0
    %v70 = vsel %vm65, %v55, 0
    %72 = vmatprep.subr.mxu0 0.0
    %73 = vmatpush1.msra.mxu0 %v56
    %74 = vmatprep.subr.mxu0 0.0
    %75 = vmatpush1.msra.mxu0 %v57
    %76 = vmatprep.subr.mxu0 0.0
    %77 = vmatpush1.msra.mxu0 0.0
    %78 = vmatprep.subr.mxu0 0.0
    %79 = vmatpush1.msra.mxu0 0.0
    %80 = vmatprep.subr.mxu0 0.0
    %81 = vmatpush1.msra.mxu0 0.0
    %82 = vmatprep.subr.mxu0 0.0
    %83 = vmatpush1.msra.mxu0 0.0
    %84 = vmatprep.subr.mxu0 0.0
    %85 = vmatpush1.msra.mxu0 0.0
    %86 = vmatprep.subr.mxu0 0.0
    %87 = vmatpush1.msra.mxu0 0.0
    %88 = vmatprep.subr.mxu0 0.0
    %89 = vmatpush1.msra.mxu0 0.0
    %90 = vmatprep.subr.mxu0 0.0
    %91 = vmatpush1.msra.mxu0 0.0
    %92 = vmatprep.subr.mxu0 0.0
    %93 = vmatpush1.msra.mxu0 0.0
    %94 = vmatprep.subr.mxu0 0.0
    %95 = vmatpush1.msra.mxu0 0.0
    %96 = vmatprep.subr.mxu0 0.0
    %97 = vmatpush1.msra.mxu0 0.0
    %98 = vmatprep.subr.mxu0 0.0
    %99 = vmatpush1.msra.mxu0 0.0
    %100 = vmatprep.subr.mxu0 0.0
    %101 = vmatpush1.msra.mxu0 0.0
    %102 = vmatprep.subr.mxu0 0.0
    %103 = vmatpush1.msra.mxu0 0.0
    %104 = vmatprep.subr.mxu0 0.0
    %105 = vmatpush1.msra.mxu0 0.0
    %106 = vmatprep.subr.mxu0 0.0
    %107 = vmatpush1.msra.mxu0 0.0
    %108 = vmatprep.subr.mxu0 0.0
    %109 = vmatpush1.msra.mxu0 0.0
    %110 = vmatprep.subr.mxu0 0.0
    %111 = vmatpush1.msra.mxu0 0.0
    %112 = vmatprep.subr.mxu0 0.0
    %113 = vmatpush1.msra.mxu0 0.0
    %114 = vmatprep.subr.mxu0 0.0
    %115 = vmatpush1.msra.mxu0 0.0
    %116 = vmatprep.subr.mxu0 0.0
    %117 = vmatpush1.msra.mxu0 0.0
    %118 = vmatprep.subr.mxu0 0.0
    %119 = vmatpush1.msra.mxu0 0.0
    %120 = vmatprep.subr.mxu0 0.0
    %121 = vmatpush1.msra.mxu0 0.0
    %122 = vmatprep.subr.mxu0 0.0
    %123 = vmatpush1.msra.mxu0 0.0
    %124 = vmatprep.subr.mxu0 0.0
    %125 = vmatpush1.msra.mxu0 0.0
    %126 = vmatprep.subr.mxu0 0.0
    %127 = vmatpush1.msra.mxu0 0.0
    %128 = vmatprep.subr.mxu0 0.0
    %129 = vmatpush1.msra.mxu0 0.0
    %130 = vmatprep.subr.mxu0 0.0
    %131 = vmatpush1.msra.mxu0 0.0
    %132 = vmatprep.subr.mxu0 0.0
    %133 = vmatpush1.msra.mxu0 0.0
    %134 = vmatprep.subr.mxu0 0.0
    %135 = vmatpush1.msra.mxu0 0.0
    %136 = vmatprep.mubr.f32.mxu0 0.0
    %137 = vmatmul.mubr.f32.gmra.mrb[0].mxu0 %v67
    %v138 = vpop.f32.mrb[0].mxu0
    %v139 = vadd.f32 %v63, %v138
    %v140 = vpop.f32.mrb[0].mxu0
    %141 = vmatprep.mubr.f32.mxu0 0.0
    %142 = vmatmul.mubr.f32.gmra.mrb[0].mxu0 %v70
    %v143 = vpop.f32.mrb[0].mxu0
    %v144 = vadd.f32 %v63, %v143
    %v145 = vpop.f32.mrb[0].mxu0
    %146 = vdwg.mxu0
    %v147 = vmax.f32 %v139, 0.0
    %v148 = vmax.f32 %v144, 0.0
    %v149 = vld [vmem:[%s3] sm:$0xff]
    %v150 = vld [vmem:[%s3 + $0x8] sm:$0xff]
    %v151 = vld [vmem:[%s3 + $0x10] sm:$0xff]
    %v152 = vld [vmem:[%s3 + $0x18] sm:$0xff]
    %v153 = vld [vmem:[%s4] sm:$0x1]
    %v155 = vlaneseq
    %v156 = vshrl.u32 %v155, 7
    %v157 = vsub.s32 0, %v156
    %v158 = vrot.slane %v153, %v157
    %vm160 = vcmask 261120
    %v162 = vsel %vm160, %v147, 0
    %v165 = vsel %vm160, %v148, 0
    %167 = vmatprep.subr.mxu0 0.0
    %168 = vmatpush1.msra.mxu0 %v149
    %169 = vmatprep.subr.mxu0 0.0
    %170 = vmatpush1.msra.mxu0 %v150
    %171 = vmatprep.subr.mxu0 0.0
    %172 = vmatpush1.msra.mxu0 %v151
    %173 = vmatprep.subr.mxu0 0.0
    %174 = vmatpush1.msra.mxu0 %v152
    %175 = vmatprep.subr.mxu0 0.0
    %176 = vmatpush1.msra.mxu0 0.0
    %177 = vmatprep.subr.mxu0 0.0
    %178 = vmatpush1.msra.mxu0 0.0
    %179 = vmatprep.subr.mxu0 0.0
    %180 = vmatpush1.msra.mxu0 0.0
    %181 = vmatprep.subr.mxu0 0.0
    %182 = vmatpush1.msra.mxu0 0.0
    %183 = vmatprep.subr.mxu0 0.0
    %184 = vmatpush1.msra.mxu0 0.0
    %185 = vmatprep.subr.mxu0 0.0
    %186 = vmatpush1.msra.mxu0 0.0
    %187 = vmatprep.subr.mxu0 0.0
    %188 = vmatpush1.msra.mxu0 0.0
    %189 = vmatprep.subr.mxu0 0.0
    %190 = vmatpush1.msra.mxu0 0.0
    %191 = vmatprep.subr.mxu0 0.0
    %192 = vmatpush1.msra.mxu0 0.0
    %193 = vmatprep.subr.mxu0 0.0
    %194 = vmatpush1.msra.mxu0 0.0
    %195 = vmatprep.subr.mxu0 0.0
    %196 = vmatpush1.msra.mxu0 0.0
    %197 = vmatprep.subr.mxu0 0.0
    %198 = vmatpush1.msra.mxu0 0.0
    %199 = vmatprep.subr.mxu0 0.0
    %200 = vmatpush1.msra.mxu0 0.0
    %201 = vmatprep.subr.mxu0 0.0
    %202 = vmatpush1.msra.mxu0 0.0
    %203 = vmatprep.subr.mxu0 0.0
    %204 = vmatpush1.msra.mxu0 0.0
    %205 = vmatprep.subr.mxu0 0.0
    %206 = vmatpush1.msra.mxu0 0.0
    %207 = vmatprep.subr.mxu0 0.0
    %208 = vmatpush1.msra.mxu0 0.0
    %209 = vmatprep.subr.mxu0 0.0
    %210 = vmatpush1.msra.mxu0 0.0
    %211 = vmatprep.subr.mxu0 0.0
    %212 = vmatpush1.msra.mxu0 0.0
    %213 = vmatprep.subr.mxu0 0.0
    %214 = vmatpush1.msra.mxu0 0.0
    %215 = vmatprep.subr.mxu0 0.0
    %216 = vmatpush1.msra.mxu0 0.0
    %217 = vmatprep.subr.mxu0 0.0
    %218 = vmatpush1.msra.mxu0 0.0
    %219 = vmatprep.subr.mxu0 0.0
    %220 = vmatpush1.msra.mxu0 0.0
    %221 = vmatprep.subr.mxu0 0.0
    %222 = vmatpush1.msra.mxu0 0.0
    %223 = vmatprep.subr.mxu0 0.0
    %224 = vmatpush1.msra.mxu0 0.0
    %225 = vmatprep.subr.mxu0 0.0
    %226 = vmatpush1.msra.mxu0 0.0
    %227 = vmatprep.subr.mxu0 0.0
    %228 = vmatpush1.msra.mxu0 0.0
    %229 = vmatprep.subr.mxu0 0.0
    %230 = vmatpush1.msra.mxu0 0.0
    %231 = vmatprep.mubr.f32.mxu0 0.0
    %232 = vmatmul.mubr.f32.gmra.mrb[0].mxu0 %v162
    %v233 = vpop.f32.mrb[0].mxu0
    %v234 = vadd.f32 %v158, %v233
    %v235 = vpop.f32.mrb[0].mxu0
    %236 = vmatprep.mubr.f32.mxu0 0.0
    %237 = vmatmul.mubr.f32.gmra.mrb[0].mxu0 %v165
    %v238 = vpop.f32.mrb[0].mxu0
    %v239 = vadd.f32 %v158, %v238
    %v240 = vpop.f32.mrb[0].mxu0
    %241 = vdwg.mxu0
    %v242 = vmax.f32 %v234, 0.0
    %v243 = vmax.f32 %v239, 0.0
    %v244 = vld [vmem:[%s5] sm:$0xff]
    %v245 = vld [vmem:[%s5 + $0x8] sm:$0xff]
    %v246 = vld [vmem:[%s5 + $0x10] sm:$0xff]
    %v247 = vld [vmem:[%s5 + $0x18] sm:$0xff]
    %v248 = vld [vmem:[%s6] sm:$0x1]
    %v250 = vlaneseq
    %v251 = vshrl.u32 %v250, 7
    %v252 = vsub.s32 0, %v251
    %v253 = vrot.slane %v248, %v252
    %v256 = vsel %vm160, %v242, 0
    %v259 = vsel %vm160, %v243, 0
    %261 = vmatprep.subr.mxu0 0.0
    %262 = vmatpush1.msra.mxu0 %v244
    %263 = vmatprep.subr.mxu0 0.0
    %264 = vmatpush1.msra.mxu0 %v245
    %265 = vmatprep.subr.mxu0 0.0
    %266 = vmatpush1.msra.mxu0 %v246
    %267 = vmatprep.subr.mxu0 0.0
    %268 = vmatpush1.msra.mxu0 %v247
    %269 = vmatprep.subr.mxu0 0.0
    %270 = vmatpush1.msra.mxu0 0.0
    %271 = vmatprep.subr.mxu0 0.0
    %272 = vmatpush1.msra.mxu0 0.0
    %273 = vmatprep.subr.mxu0 0.0
    %274 = vmatpush1.msra.mxu0 0.0
    %275 = vmatprep.subr.mxu0 0.0
    %276 = vmatpush1.msra.mxu0 0.0
    %277 = vmatprep.subr.mxu0 0.0
    %278 = vmatpush1.msra.mxu0 0.0
    %279 = vmatprep.subr.mxu0 0.0
    %280 = vmatpush1.msra.mxu0 0.0
    %281 = vmatprep.subr.mxu0 0.0
    %282 = vmatpush1.msra.mxu0 0.0
    %283 = vmatprep.subr.mxu0 0.0
    %284 = vmatpush1.msra.mxu0 0.0
    %285 = vmatprep.subr.mxu0 0.0
    %286 = vmatpush1.msra.mxu0 0.0
    %287 = vmatprep.subr.mxu0 0.0
    %288 = vmatpush1.msra.mxu0 0.0
    %289 = vmatprep.subr.mxu0 0.0
    %290 = vmatpush1.msra.mxu0 0.0
    %291 = vmatprep.subr.mxu0 0.0
    %292 = vmatpush1.msra.mxu0 0.0
    %293 = vmatprep.subr.mxu0 0.0
    %294 = vmatpush1.msra.mxu0 0.0
    %295 = vmatprep.subr.mxu0 0.0
    %296 = vmatpush1.msra.mxu0 0.0
    %297 = vmatprep.subr.mxu0 0.0
    %298 = vmatpush1.msra.mxu0 0.0
    %299 = vmatprep.subr.mxu0 0.0
    %300 = vmatpush1.msra.mxu0 0.0
    %301 = vmatprep.subr.mxu0 0.0
    %302 = vmatpush1.msra.mxu0 0.0
    %303 = vmatprep.subr.mxu0 0.0
    %304 = vmatpush1.msra.mxu0 0.0
    %305 = vmatprep.subr.mxu0 0.0
    %306 = vmatpush1.msra.mxu0 0.0
    %307 = vmatprep.subr.mxu0 0.0
    %308 = vmatpush1.msra.mxu0 0.0
    %309 = vmatprep.subr.mxu0 0.0
    %310 = vmatpush1.msra.mxu0 0.0
    %311 = vmatprep.subr.mxu0 0.0
    %312 = vmatpush1.msra.mxu0 0.0
    %313 = vmatprep.subr.mxu0 0.0
    %314 = vmatpush1.msra.mxu0 0.0
    %315 = vmatprep.subr.mxu0 0.0
    %316 = vmatpush1.msra.mxu0 0.0
    %317 = vmatprep.subr.mxu0 0.0
    %318 = vmatpush1.msra.mxu0 0.0
    %319 = vmatprep.subr.mxu0 0.0
    %320 = vmatpush1.msra.mxu0 0.0
    %321 = vmatprep.subr.mxu0 0.0
    %322 = vmatpush1.msra.mxu0 0.0
    %323 = vmatprep.subr.mxu0 0.0
    %324 = vmatpush1.msra.mxu0 0.0
    %325 = vmatprep.mubr.f32.mxu0 0.0
    %326 = vmatmul.mubr.f32.gmra.mrb[0].mxu0 %v256
    %v327 = vpop.f32.mrb[0].mxu0
    %v328 = vadd.f32 %v253, %v327
    %v329 = vpop.f32.mrb[0].mxu0
    %330 = vmatprep.mubr.f32.mxu0 0.0
    %331 = vmatmul.mubr.f32.gmra.mrb[0].mxu0 %v259
    %v332 = vpop.f32.mrb[0].mxu0
    %v333 = vadd.f32 %v253, %v332
    %v334 = vpop.f32.mrb[0].mxu0
    %335 = vdwg.mxu0
    %vm336 = vcmask 31744
    %337 = vst.msk [vmem:[%s7] sm:$0xff] %vm336, %v328
    %338 = vst.msk [vmem:[%s7 + $0x8] sm:$0xff] %vm336, %v333
    // Predicated region
    $region38: #{tpu_custom_call.1} parent=1 // pred_check
      _
    $region39: #{tpu_custom_call.1} parent=1 // pred_check_branch
      %340 = sbr.rel (0) target = $region41
    $region40: #{tpu_custom_call.1} parent=1 // pred_region
      _
    $region41: #{tpu_custom_call.1} parent=1 // pred_fallthru
      _
    // Predicated region
    $region42: #{tpu_custom_call.1} parent=1 // pred_check
      _
    $region43: #{tpu_custom_call.1} parent=1 // pred_check_branch
      %342 = sbr.rel (0) target = $region45
    $region44: #{tpu_custom_call.1} parent=1 // pred_region
      _
    $region45: #{tpu_custom_call.1} parent=1 // pred_fallthru
      _
    %343 = vsyncpa [#allocation3], 1
    %344 = vsyncpa [#allocation5], 1

</llo_original>
